<compile_context>
chip_gen: v6e
topology: v6e:2x2x1
jax: 0.10.0
libtpu: 0.0.40
codegen_flags: <defaults>
</compile_context>

<pallas_src>
import functools

import numpy as np
import jax
import jax.numpy as jnp
from jax.experimental import pallas as pl
from jax.experimental.pallas import tpu as pltpu

SR = 44100
NFIR = 220
WINDOW_SIZE = NFIR + 1      # 221 FIR taps
PAD = NFIR // 2             # 110 -> "same" length output


def _round_up(x, m):
    return (x + m - 1) // m * m


# ----------------------------------------------------------------------------
# __init__-time constant tables (pure numpy, deterministic)
# ----------------------------------------------------------------------------
def _interp_tables(sr=SR, nfir=NFIR):
    aud = np.array([250, 500, 1000, 2000, 4000, 6000])
    aud_fv = np.append(np.append(0, aud), sr // 2)
    linear_fv = np.linspace(0, nfir, nfir + 1) / nfir * sr // 2
    interval_freq = np.zeros([len(linear_fv), 2])
    interval_idx = np.zeros([len(linear_fv), 2], dtype=int)
    for i in range(len(linear_fv)):
        for j in range(len(aud_fv) - 1):
            if aud_fv[j] <= linear_fv[i] < aud_fv[j + 1]:
                interval_freq[i, 0] = aud_fv[j]
                interval_freq[i, 1] = aud_fv[j + 1]
                interval_idx[i, 0] = j
                interval_idx[i, 1] = j + 1
    interval_freq[-1, 0] = aud_fv[-2]
    interval_freq[-1, 1] = aud_fv[-1]
    interval_idx[-1, 0] = len(aud_fv) - 2
    interval_idx[-1, 1] = len(aud_fv) - 1
    x2_minus_x1 = (interval_freq[:, 1] - interval_freq[:, 0]).astype(np.float32)
    x_minus_x1 = (linear_fv - interval_freq[:, 0]).astype(np.float32)
    return (jnp.asarray(interval_idx),
            jnp.asarray(x2_minus_x1),
            jnp.asarray(x_minus_x1))


# ----------------------------------------------------------------------------
# forward-time FIR-filter construction (tiny tensors -> plain JAX glue)
# TODO(synk): irfft / hann window have no Pallas primitive; kept in plain JAX.
# ----------------------------------------------------------------------------
def build_fir_filter(amp_param, interval_idx, x2_minus_x1, x_minus_x1):
    amp = jnp.power(10.0, jnp.abs(amp_param) / 20.0)                 # (6,)
    amp = jnp.concatenate([amp[:1], amp, amp[-1:]])                  # (8,)
    y = amp[interval_idx]                                            # (221, 2)
    y2_minus_y1 = y[:, 1] - y[:, 0]
    y1 = y[:, 0]
    gain = y2_minus_y1 * x_minus_x1 / x2_minus_x1 + y1               # (221,)
    magnitudes = gain.astype(jnp.complex64)                          # zero phase
    impulse_response = jnp.fft.irfft(magnitudes).astype(jnp.float32)  # (440,)
    window_size = WINDOW_SIZE + 1                                    # 222
    n = jnp.arange(window_size, dtype=jnp.float32)
    # torch.hann_window default is periodic -> denominator = window_size
    window = 0.5 * (1.0 - jnp.cos(2.0 * jnp.pi * n / window_size))
    ir_size = impulse_response.shape[-1]                             # 440
    half_idx = (window_size + 1) // 2                                # 111
    padding = ir_size - window_size                                  # 218
    window = jnp.concatenate(
        [window[half_idx:], jnp.zeros([padding], jnp.float32), window[:half_idx]])
    impulse_response = impulse_response * window
    first_half_start = ir_size - (half_idx - 1)                      # 330
    second_half_end = half_idx                                       # 111
    fir = jnp.concatenate(
        [impulse_response[first_half_start:], impulse_response[:second_half_end]])
    return fir                                                       # (221,)


def _band_tile(fir, k_win, tile_l):
    """Small translation-invariant band tile: W[i, t] = fir[i - t] (else 0)."""
    i = jnp.arange(k_win)[:, None]
    t = jnp.arange(tile_l)[None, :]
    d = i - t
    valid = (d >= 0) & (d < WINDOW_SIZE)
    return jnp.where(
        valid, fir[jnp.clip(d, 0, WINDOW_SIZE - 1)], 0.0).astype(jnp.float32)


# ----------------------------------------------------------------------------
# Pallas kernel: framed FIR conv as a tall-skinny MXU matmul
# ----------------------------------------------------------------------------
def _fir_frame_matmul_kernel(f_ref, w_ref, o_ref):
    # f_ref: (tile_m, k_win)   frames of the padded signal
    # w_ref: (k_win, tile_l)   constant band tile, VMEM-resident (index_map (0,0))
    # o_ref: (tile_m, tile_l)  output tile
    o_ref[...] = jnp.dot(f_ref[...], w_ref[...],
                         preferred_element_type=jnp.float32)


@functools.partial(jax.jit, static_argnames=("tile_l", "tile_m"))
def audiometric_fir_forward(x, amp_param, interval_idx, x2_minus_x1, x_minus_x1,
                            *, tile_l=128, tile_m=128):
    """x: [N, 1, L] float32 -> [N, 1, L] float32 (== F.conv1d(x, fir, padding=110)).

    tile_l: output lane width per frame (128 matches v5e MXU; use 256 on v6e/v7x).
    tile_m: frames per grid step (M dim of the matmul).
    """
    n_batch, n_chan, length = x.shape
    assert n_chan == 1

    fir = build_fir_filter(amp_param, interval_idx, x2_minus_x1, x_minus_x1)  # (221,)

    # --- frame geometry -----------------------------------------------------
    win = tile_l + WINDOW_SIZE - 1            # tile_l + 220
    k_win = _round_up(win, 128)               # lane-aligned K (384 for tile_l=128)
    n_tiles = pl.cdiv(length, tile_l)
    length_pad = n_tiles * tile_l

    w_small = _band_tile(fir, k_win, tile_l)  # (k_win, tile_l), ~190 KB

    # "same" padding (110 each side) + extra zeros for tile rounding / k_win alignment.
    # TODO(synk): the pad + im2col gather is one extra HBM pass; could be folded
    # into an in-kernel manual-DMA gather for very long signals.
    right_pad = PAD + (length_pad - length) + (k_win - win)
    x_pad = jnp.pad(x[:, 0, :], ((0, 0), (PAD, right_pad)))   # (N, length_pad + k_win - tile_l)

    # im2col framing: one overlapping window per output tile -> M = N * n_tiles.
    starts = jnp.arange(n_tiles) * tile_l
    idx = starts[:, None] + jnp.arange(k_win)[None, :]        # (n_tiles, k_win)
    frames = x_pad[:, idx].reshape(n_batch * n_tiles, k_win)  # (M, k_win)

    m_total = n_batch * n_tiles
    if m_total >= tile_m:
        m_pad = _round_up(m_total, tile_m)
        tile_m_eff = tile_m
    else:
        m_pad = _round_up(m_total, 8)
        tile_m_eff = m_pad
    if m_pad != m_total:
        frames = jnp.pad(frames, ((0, m_pad - m_total), (0, 0)))

    out_frames = pl.pallas_call(
        _fir_frame_matmul_kernel,
        out_shape=jax.ShapeDtypeStruct((m_pad, tile_l), jnp.float32),
        grid_spec=pltpu.PrefetchScalarGridSpec(
            num_scalar_prefetch=0,
            grid=(m_pad // tile_m_eff,),
            in_specs=[
                pl.BlockSpec((tile_m_eff, k_win), lambda m: (m, 0)),  # frame block
                pl.BlockSpec((k_win, tile_l), lambda m: (0, 0)),      # constant band tile
            ],
            out_specs=pl.BlockSpec((tile_m_eff, tile_l), lambda m: (m, 0)),
        ),
        compiler_params=pltpu.CompilerParams(
            dimension_semantics=("parallel",)),
        cost_estimate=pl.CostEstimate(
            flops=2 * m_pad * k_win * tile_l,
            transcendentals=0,
            bytes_accessed=4 * (m_pad * k_win + k_win * tile_l + m_pad * tile_l)),
    )(frames, w_small)

    out = out_frames[:m_total].reshape(n_batch, n_tiles * tile_l)[:, :length]
    return out[:, None, :]                                    # [N, 1, L]


if __name__ == "__main__":
    key = jax.random.PRNGKey(0)
    n_batch, length = 2, 256
    x = jax.random.normal(key, (n_batch, 1, length), dtype=jnp.float32)

    # Deterministic parameter init (module: nn.Parameter(ones(6)))
    amp_param = jnp.ones((6,), jnp.float32)
    interval_idx, x2_minus_x1, x_minus_x1 = _interp_tables()

    out = audiometric_fir_forward(x, amp_param, interval_idx, x2_minus_x1, x_minus_x1)
    out = jax.block_until_ready(out)
    assert out.shape == (n_batch, 1, length)
    assert out.dtype == jnp.float32

    # Reference: cross-correlation with 110 zero-padding == F.conv1d semantics
    fir = build_fir_filter(amp_param, interval_idx, x2_minus_x1, x_minus_x1)
    ref = jax.vmap(lambda row: jnp.convolve(row, fir[::-1], mode="same"))(x[:, 0, :])
    assert jnp.allclose(out[:, 0, :], ref, rtol=1e-4, atol=1e-4)

    print("KERNEL_OK")
</pallas_src>

<mosaic_0001>
module attributes {stable_mosaic.version = 11 : i64} {
  func.func @_fir_frame_matmul_kernel(%arg0: i32, %arg1: memref<8x384xf32, #tpu.memory_space<vmem>>, %arg2: memref<384x128xf32, #tpu.memory_space<vmem>>, %arg3: memref<8x128xf32, #tpu.memory_space<vmem>>) attributes {dimension_semantics = [#tpu.dimension_semantics<parallel>], iteration_bounds = array<i64: 1>, scalar_prefetch = 0 : i64, scratch_operands = 0 : i64, tpu.core_type = #tpu.core_type<tc>, window_params = [{transform_indices = @transform_0, window_bounds = array<i64: 8, 384>}, {pipeline_mode = #tpu.pipeline_mode<synchronous>, transform_indices = @transform_1, window_bounds = array<i64: 384, 128>}, {transform_indices = @transform_2, window_bounds = array<i64: 8, 128>}]} {
    %c0 = arith.constant 0 : index
    %c0_0 = arith.constant 0 : index
    %0 = vector.load %arg1[%c0, %c0_0] : memref<8x384xf32, #tpu.memory_space<vmem>>, vector<8x384xf32>
    %c0_1 = arith.constant 0 : index
    %c0_2 = arith.constant 0 : index
    %1 = vector.load %arg2[%c0_1, %c0_2] : memref<384x128xf32, #tpu.memory_space<vmem>>, vector<384x128xf32>
    %cst = arith.constant dense<0.000000e+00> : vector<8x128xf32>
    %2 = tpu.matmul %0, %1, %cst {dimension_numbers = #tpu.dot_dimension_numbers<[1], [0], [0], [1], [0, 0, 1, 1], [], []>} : vector<8x384xf32>, vector<384x128xf32>, vector<8x128xf32> -> vector<8x128xf32>
    %c0_3 = arith.constant 0 : index
    %c0_4 = arith.constant 0 : index
    %3 = vector.load %arg3[%c0_3, %c0_4] : memref<8x128xf32, #tpu.memory_space<vmem>>, vector<8x128xf32>
    tpu.vector_store %arg3[%c0_3, %c0_4], %2 {strides = array<i32>} : memref<8x128xf32, #tpu.memory_space<vmem>>, vector<8x128xf32>,
    return
  }
  func.func @transform_0(%arg0: i32) -> (i32, i32) {
    %c0_i32 = arith.constant 0 : i32
    %c0_i32_0 = arith.constant 0 : i32
    return %arg0, %c0_i32 : i32, i32
  }
  func.func @transform_1(%arg0: i32) -> (i32, i32) {
    %c0_i32 = arith.constant 0 : i32
    %c0_i32_0 = arith.constant 0 : i32
    %c0_i32_1 = arith.constant 0 : i32
    return %c0_i32, %c0_i32_0 : i32, i32
  }
  func.func @transform_2(%arg0: i32) -> (i32, i32) {
    %c0_i32 = arith.constant 0 : i32
    %c0_i32_0 = arith.constant 0 : i32
    return %arg0, %c0_i32 : i32, i32
  }
}

</mosaic_0001>

<llo_original>
// kernel: reverse.2
$region0: #{reverse.2}
  %s0 = inlined_call_operand.vmem [shape: f32[256], index: 0, kind: input, shape index: {}]
  %s1 = inlined_call_operand.vmem [shape: f32[256], index: 1, kind: output, shape index: {}]
  %v2 = vlaneseq
  %v3 = vsub.s32 127, %v2
  %4 = vset.pattern.permute.xlu0 %v3
  $region1: #{reverse.2} parent=0
    #allocation0 [shape = 'u8[8192]{0}', space=vmem, size = 0x2000, scoped, tag = 'operand span for operand 0']
    #allocation1 [shape = 'u8[2048]{0}', space=vmem, size = 0x800, scoped, tag = 'packed  for operand 0']
    #allocation2 [shape = 'u8[4096]{0}', space=vmem, size = 0x1000, scoped, tag = 'operand span for operand 1']
    #allocation3 [shape = 'u8[1024]{0}', space=vmem, size = 0x400, scoped, tag = 'packed  for operand 1']
    %s5 = scalar_lea.vmem [#allocation1], 2
    // Predicated region
    $region2: #{reverse.2} parent=1 // pred_check
      _
    $region3: #{reverse.2} parent=1 // pred_check_branch
      %7 = sbr.rel (0) target = $region5
    $region4: #{reverse.2} parent=1 // pred_region
      // Predicated region
      $region6: #{reverse.2} parent=4 // pred_check
        _
      $region7: #{reverse.2} parent=4 // pred_check_branch
        %9 = sbr.rel target = $region9
      $region8: #{reverse.2} parent=4 // pred_region
        // Predicated region
        $region21: #{reverse.2} parent=8 // pred_check
          _
        $region22: #{reverse.2} parent=8 // pred_check_branch
          %25 = sbr.rel (0) target = $region24
        $region23: #{reverse.2} parent=8 // pred_region
          %s27 = ssub.s32 4, 1
          loop: start=0, step=1, limit=1
          $region25: #{reverse.2} parent=23 // loop_pre_header
            _
          $region26: #{reverse.2} parent=23 // loop_header
            %s29 = sphi 0, %s33
            %p30 = scmp.ge.s32.totalorder %s29, 1
            %s34 = sphi %s0, %s0
            %s35 = sphi %s5, %s5
          $region27: #{reverse.2} parent=23 // loop_header_branch
            %32 = sbr.rel (%p30) target = $region31
          $region28: #{reverse.2} parent=23 // loop_body
            %v36 = vld [vmem:[%s34] sm:%s27]
            %37 = vst [vmem:[%s35] sm:%s27] %v36
          $region29: #{reverse.2} parent=23 // loop_footer
            %s33 = sadd.s32 1, %s29
          $region30: #{reverse.2} parent=23 // loop_footer_branch
            %28 = sbr.rel target = $region26
          $region31: #{reverse.2} parent=23 // loop_exit
            _
        $region24: #{reverse.2} parent=8 // pred_fallthru
          _
      $region9: #{reverse.2} parent=4 // pred_fallthru
        _
      // Predicated region
      $region10: #{reverse.2} parent=4 // pred_check
        _
      $region11: #{reverse.2} parent=4 // pred_check_branch
        %11 = sbr.rel (0) target = $region13
      $region12: #{reverse.2} parent=4 // pred_region
        %s13 = ssub.s32 4, 1
        loop: start=0, step=1, limit=1
        $region14: #{reverse.2} parent=12 // loop_pre_header
          _
        $region15: #{reverse.2} parent=12 // loop_header
          %s15 = sphi 0, %s19
          %p16 = scmp.ge.s32.totalorder %s15, 1
          %s20 = sphi %s0, %s0
          %s21 = sphi %s5, %s5
        $region16: #{reverse.2} parent=12 // loop_header_branch
          %18 = sbr.rel (%p16) target = $region20
        $region17: #{reverse.2} parent=12 // loop_body
          %v22 = vld [vmem:[%s20] sm:%s13]
          %23 = vst [vmem:[%s21] sm:%s13] %v22
        $region18: #{reverse.2} parent=12 // loop_footer
          %s19 = sadd.s32 1, %s15
        $region19: #{reverse.2} parent=12 // loop_footer_branch
          %14 = sbr.rel target = $region15
        $region20: #{reverse.2} parent=12 // loop_exit
          _
      $region13: #{reverse.2} parent=4 // pred_fallthru
        _
    $region5: #{reverse.2} parent=1 // pred_fallthru
      _
    %38 = vnop
    %s40 = sshll.u32 1, 2
    %s41 = ssub.s32 %s40, 1
    %s42 = scalar_lea.vmem [#allocation1], 2
    %v43 = vld [vmem:[%s42] sm:%s41]
    %s44 = scalar_lea.vmem [#allocation0], 8
    %45 = vst [vmem:[%s44] sm:%s41] %v43
    %v46 = vld [vmem:[#allocation1] sm:%s41]
    %47 = vst [vmem:[#allocation0] sm:%s41] %v46
    %s48 = scalar_lea.vmem [#allocation0], 7
    %v49 = vld [vmem:[%s48] ss:$-1 sm:$0xff]
    %v50 = vrot.slane %v49, 6
    %51 = vperm.xlu0 %4, %v50
    %v52 = vpop.permute.xlu0 %51
    %53 = vst [vmem:[#allocation2] sm:$0xff] %v52
    %s54 = scalar_lea.vmem [#allocation0], 8
    %s55 = scalar_lea.vmem %s54, 7 [#allocation0]
    %v56 = vld [vmem:[%s55] ss:$-1 sm:$0xff]
    %v57 = vrot.slane %v56, 6
    %58 = vperm.xlu0 %4, %v57
    %v59 = vpop.permute.xlu0 %58
    %v60 = vlaneseq
    %v61 = vshrl.u32 %v60, 7
    %vm62 = vcmp.lt.s32.totalorder %v61, 2
    %63 = vst.msk [vmem:[#allocation2] sm:$0xff] %vm62, %v59
    %s65 = sshll.u32 1, 2
    %s66 = ssub.s32 %s65, 1
    %v68 = vld [vmem:[#allocation2] sm:%s66]
    %s69 = sshll.u32 1, 2
    %s70 = ssub.s32 %s69, 1
    %71 = vst [vmem:[#allocation3] sm:%s70] %v68
    // Predicated region
    $region32: #{reverse.2} parent=1 // pred_check
      _
    $region33: #{reverse.2} parent=1 // pred_check_branch
      %73 = sbr.rel (0) target = $region35
    $region34: #{reverse.2} parent=1 // pred_region
      // Predicated region
      $region36: #{reverse.2} parent=34 // pred_check
        _
      $region37: #{reverse.2} parent=34 // pred_check_branch
        %75 = sbr.rel target = $region39
      $region38: #{reverse.2} parent=34 // pred_region
        // Predicated region
        $region51: #{reverse.2} parent=38 // pred_check
          _
        $region52: #{reverse.2} parent=38 // pred_check_branch
          %91 = sbr.rel (0) target = $region54
        $region53: #{reverse.2} parent=38 // pred_region
          %s93 = ssub.s32 4, 1
          loop: start=0, step=1, limit=1
          $region55: #{reverse.2} parent=53 // loop_pre_header
            _
          $region56: #{reverse.2} parent=53 // loop_header
            %s95 = sphi 0, %s99
            %p96 = scmp.ge.s32.totalorder %s95, 1
            %s100 = sphi [#allocation3], [#allocation3]
            %s101 = sphi %s1, %s1
          $region57: #{reverse.2} parent=53 // loop_header_branch
            %98 = sbr.rel (%p96) target = $region61
          $region58: #{reverse.2} parent=53 // loop_body
            %v102 = vld [vmem:[%s100] sm:%s93]
            %103 = vst [vmem:[%s101] sm:%s93] %v102
          $region59: #{reverse.2} parent=53 // loop_footer
            %s99 = sadd.s32 1, %s95
          $region60: #{reverse.2} parent=53 // loop_footer_branch
            %94 = sbr.rel target = $region56
          $region61: #{reverse.2} parent=53 // loop_exit
            _
        $region54: #{reverse.2} parent=38 // pred_fallthru
          _
      $region39: #{reverse.2} parent=34 // pred_fallthru
        _
      // Predicated region
      $region40: #{reverse.2} parent=34 // pred_check
        _
      $region41: #{reverse.2} parent=34 // pred_check_branch
        %77 = sbr.rel (0) target = $region43
      $region42: #{reverse.2} parent=34 // pred_region
        %s79 = ssub.s32 4, 1
        loop: start=0, step=1, limit=1
        $region44: #{reverse.2} parent=42 // loop_pre_header
          _
        $region45: #{reverse.2} parent=42 // loop_header
          %s81 = sphi 0, %s85
          %p82 = scmp.ge.s32.totalorder %s81, 1
          %s86 = sphi [#allocation3], [#allocation3]
          %s87 = sphi %s1, %s1
        $region46: #{reverse.2} parent=42 // loop_header_branch
          %84 = sbr.rel (%p82) target = $region50
        $region47: #{reverse.2} parent=42 // loop_body
          %v88 = vld [vmem:[%s86] sm:%s79]
          %89 = vst [vmem:[%s87] sm:%s79] %v88
        $region48: #{reverse.2} parent=42 // loop_footer
          %s85 = sadd.s32 1, %s81
        $region49: #{reverse.2} parent=42 // loop_footer_branch
          %80 = sbr.rel target = $region45
        $region50: #{reverse.2} parent=42 // loop_exit
          _
      $region43: #{reverse.2} parent=34 // pred_fallthru
        _
    $region35: #{reverse.2} parent=1 // pred_fallthru
      _
    %104 = vnop

// kernel: audiometric_fir_forward.1
$region0: #{audiometric_fir_forward.1}
  #allocation0 [shape = 'u32[]', space=smem, size = 0x4, offset = 0x4, fixed_abs, tag = 'smem constant byte address 0x4 - core index']
  #allocation1 [shape = 'u32[144,128]{1,0:T(1,128)}', space=vmem, size = 0x12000, scoped, tag = 'internal scratch']
  %s0 = inlined_call_operand.vmem [shape: f32[8,384], index: 0, kind: input, shape index: {}]
  %s1 = inlined_call_operand.vmem [shape: f32[384,128], index: 1, kind: input, shape index: {}]
  %s2 = inlined_call_operand.vmem [shape: f32[8,128], index: 2, kind: output, shape index: {}]
  %s3 = sld [smem:[#allocation0]]
  $region18: #{audiometric_fir_forward.1} parent=0
    _
  %s5 = ssub.s32 1, %s3
  %s6 = scalar_select 0, %s5, %s3
  // Predicated region
  $region2: #{audiometric_fir_forward.1} parent=0 // pred_check
    _
  $region3: #{audiometric_fir_forward.1} parent=0 // pred_check_branch
    %8 = sbr.rel (0) target = $region5
  $region4: #{audiometric_fir_forward.1} parent=0 // pred_region
    _
  $region5: #{audiometric_fir_forward.1} parent=0 // pred_fallthru
    _
  // Predicated region
  $region6: #{audiometric_fir_forward.1} parent=0 // pred_check
    _
  $region7: #{audiometric_fir_forward.1} parent=0 // pred_check_branch
    %10 = sbr.rel (0) target = $region9
  $region8: #{audiometric_fir_forward.1} parent=0 // pred_region
    _
  $region9: #{audiometric_fir_forward.1} parent=0 // pred_fallthru
    _
  %v11 = vld [vmem:[%s0] sm:$0xff]
  %v12 = vld [vmem:[%s0 + $0x8] sm:$0xff]
  %v13 = vld [vmem:[%s0 + $0x10] sm:$0xff]
  %v14 = vld [vmem:[%s1] sm:$0xff]
  %v15 = vld [vmem:[%s1 + $0x8] sm:$0xff]
  %v16 = vld [vmem:[%s1 + $0x10] sm:$0xff]
  %v17 = vld [vmem:[%s1 + $0x18] sm:$0xff]
  %v18 = vld [vmem:[%s1 + $0x20] sm:$0xff]
  %v19 = vld [vmem:[%s1 + $0x28] sm:$0xff]
  %v20 = vld [vmem:[%s1 + $0x30] sm:$0xff]
  %v21 = vld [vmem:[%s1 + $0x38] sm:$0xff]
  %v22 = vld [vmem:[%s1 + $0x40] sm:$0xff]
  %v23 = vld [vmem:[%s1 + $0x48] sm:$0xff]
  %v24 = vld [vmem:[%s1 + $0x50] sm:$0xff]
  %v25 = vld [vmem:[%s1 + $0x58] sm:$0xff]
  %v26 = vld [vmem:[%s1 + $0x60] sm:$0xff]
  %v27 = vld [vmem:[%s1 + $0x68] sm:$0xff]
  %v28 = vld [vmem:[%s1 + $0x70] sm:$0xff]
  %v29 = vld [vmem:[%s1 + $0x78] sm:$0xff]
  %v30 = vld [vmem:[%s1 + $0x80] sm:$0xff]
  %v31 = vld [vmem:[%s1 + $0x88] sm:$0xff]
  %v32 = vld [vmem:[%s1 + $0x90] sm:$0xff]
  %v33 = vld [vmem:[%s1 + $0x98] sm:$0xff]
  %v34 = vld [vmem:[%s1 + $0xa0] sm:$0xff]
  %v35 = vld [vmem:[%s1 + $0xa8] sm:$0xff]
  %v36 = vld [vmem:[%s1 + $0xb0] sm:$0xff]
  %v37 = vld [vmem:[%s1 + $0xb8] sm:$0xff]
  %v38 = vld [vmem:[%s1 + $0xc0] sm:$0xff]
  %v39 = vld [vmem:[%s1 + $0xc8] sm:$0xff]
  %v40 = vld [vmem:[%s1 + $0xd0] sm:$0xff]
  %v41 = vld [vmem:[%s1 + $0xd8] sm:$0xff]
  %v42 = vld [vmem:[%s1 + $0xe0] sm:$0xff]
  %v43 = vld [vmem:[%s1 + $0xe8] sm:$0xff]
  %v44 = vld [vmem:[%s1 + $0xf0] sm:$0xff]
  %v45 = vld [vmem:[%s1 + $0xf8] sm:$0xff]
  %v46 = vld [vmem:[%s1 + $0x100] sm:$0xff]
  %v47 = vld [vmem:[%s1 + $0x108] sm:$0xff]
  %v48 = vld [vmem:[%s1 + $0x110] sm:$0xff]
  %v49 = vld [vmem:[%s1 + $0x118] sm:$0xff]
  %v50 = vld [vmem:[%s1 + $0x120] sm:$0xff]
  %v51 = vld [vmem:[%s1 + $0x128] sm:$0xff]
  %v52 = vld [vmem:[%s1 + $0x130] sm:$0xff]
  %v53 = vld [vmem:[%s1 + $0x138] sm:$0xff]
  %v54 = vld [vmem:[%s1 + $0x140] sm:$0xff]
  %v55 = vld [vmem:[%s1 + $0x148] sm:$0xff]
  %v56 = vld [vmem:[%s1 + $0x150] sm:$0xff]
  %v57 = vld [vmem:[%s1 + $0x158] sm:$0xff]
  %v58 = vld [vmem:[%s1 + $0x160] sm:$0xff]
  %v59 = vld [vmem:[%s1 + $0x168] sm:$0xff]
  %v60 = vld [vmem:[%s1 + $0x170] sm:$0xff]
  %v61 = vld [vmem:[%s1 + $0x178] sm:$0xff]
  %62 = vmatprep.subr.mxu0 0.0
  %63 = vmatpush1.msra.mxu0 %v29
  %64 = vmatprep.subr.mxu0 0.0
  %65 = vmatpush1.msra.mxu0 %v28
  %66 = vmatprep.subr.mxu0 0.0
  %67 = vmatpush1.msra.mxu0 %v27
  %68 = vmatprep.subr.mxu0 0.0
  %69 = vmatpush1.msra.mxu0 %v26
  %70 = vmatprep.subr.mxu0 0.0
  %71 = vmatpush1.msra.mxu0 %v25
  %72 = vmatprep.subr.mxu0 0.0
  %73 = vmatpush1.msra.mxu0 %v24
  %74 = vmatprep.subr.mxu0 0.0
  %75 = vmatpush1.msra.mxu0 %v23
  %76 = vmatprep.subr.mxu0 0.0
  %77 = vmatpush1.msra.mxu0 %v22
  %78 = vmatprep.subr.mxu0 0.0
  %79 = vmatpush1.msra.mxu0 %v21
  %80 = vmatprep.subr.mxu0 0.0
  %81 = vmatpush1.msra.mxu0 %v20
  %82 = vmatprep.subr.mxu0 0.0
  %83 = vmatpush1.msra.mxu0 %v19
  %84 = vmatprep.subr.mxu0 0.0
  %85 = vmatpush1.msra.mxu0 %v18
  %86 = vmatprep.subr.mxu0 0.0
  %87 = vmatpush1.msra.mxu0 %v17
  %88 = vmatprep.subr.mxu0 0.0
  %89 = vmatpush1.msra.mxu0 %v16
  %90 = vmatprep.subr.mxu0 0.0
  %91 = vmatpush1.msra.mxu0 %v15
  %92 = vmatprep.subr.mxu0 0.0
  %93 = vmatpush1.msra.mxu0 %v14
  %94 = vmatprep.subr.mxu0 0.0
  %95 = vmatpush2.msra.mxu0 %v45
  %96 = vmatprep.subr.mxu0 0.0
  %97 = vmatpush2.msra.mxu0 %v44
  %98 = vmatprep.subr.mxu0 0.0
  %99 = vmatpush2.msra.mxu0 %v43
  %100 = vmatprep.subr.mxu0 0.0
  %101 = vmatpush2.msra.mxu0 %v42
  %102 = vmatprep.subr.mxu0 0.0
  %103 = vmatpush2.msra.mxu0 %v41
  %104 = vmatprep.subr.mxu0 0.0
  %105 = vmatpush2.msra.mxu0 %v40
  %106 = vmatprep.subr.mxu0 0.0
  %107 = vmatpush2.msra.mxu0 %v39
  %108 = vmatprep.subr.mxu0 0.0
  %109 = vmatpush2.msra.mxu0 %v38
  %110 = vmatprep.subr.mxu0 0.0
  %111 = vmatpush2.msra.mxu0 %v37
  %112 = vmatprep.subr.mxu0 0.0
  %113 = vmatpush2.msra.mxu0 %v36
  %114 = vmatprep.subr.mxu0 0.0
  %115 = vmatpush2.msra.mxu0 %v35
  %116 = vmatprep.subr.mxu0 0.0
  %117 = vmatpush2.msra.mxu0 %v34
  %118 = vmatprep.subr.mxu0 0.0
  %119 = vmatpush2.msra.mxu0 %v33
  %120 = vmatprep.subr.mxu0 0.0
  %121 = vmatpush2.msra.mxu0 %v32
  %122 = vmatprep.subr.mxu0 0.0
  %123 = vmatpush2.msra.mxu0 %v31
  %124 = vmatprep.subr.mxu0 0.0
  %125 = vmatpush2.msra.mxu0 %v30
  %126 = vmatprep.mubr.f32.mxu0 %v12
  %127 = vmatmul.mubr.f32.gmra.mxu0 %v11
  %v128 = vpop.f32.mrf.mxu0
  %v129 = vadd.f32 0.0, %v128
  %v130 = vpop.f32.mrf.mxu0
  %131 = vdwg.mxu0
  %132 = vmatprep.subr.mxu0 0.0
  %133 = vmatpush1.msra.mxu0 %v61
  %134 = vmatprep.subr.mxu0 0.0
  %135 = vmatpush1.msra.mxu0 %v60
  %136 = vmatprep.subr.mxu0 0.0
  %137 = vmatpush1.msra.mxu0 %v59
  %138 = vmatprep.subr.mxu0 0.0
  %139 = vmatpush1.msra.mxu0 %v58
  %140 = vmatprep.subr.mxu0 0.0
  %141 = vmatpush1.msra.mxu0 %v57
  %142 = vmatprep.subr.mxu0 0.0
  %143 = vmatpush1.msra.mxu0 %v56
  %144 = vmatprep.subr.mxu0 0.0
  %145 = vmatpush1.msra.mxu0 %v55
  %146 = vmatprep.subr.mxu0 0.0
  %147 = vmatpush1.msra.mxu0 %v54
  %148 = vmatprep.subr.mxu0 0.0
  %149 = vmatpush1.msra.mxu0 %v53
  %150 = vmatprep.subr.mxu0 0.0
  %151 = vmatpush1.msra.mxu0 %v52
  %152 = vmatprep.subr.mxu0 0.0
  %153 = vmatpush1.msra.mxu0 %v51
  %154 = vmatprep.subr.mxu0 0.0
  %155 = vmatpush1.msra.mxu0 %v50
  %156 = vmatprep.subr.mxu0 0.0
  %157 = vmatpush1.msra.mxu0 %v49
  %158 = vmatprep.subr.mxu0 0.0
  %159 = vmatpush1.msra.mxu0 %v48
  %160 = vmatprep.subr.mxu0 0.0
  %161 = vmatpush1.msra.mxu0 %v47
  %162 = vmatprep.subr.mxu0 0.0
  %163 = vmatpush1.msra.mxu0 %v46
  %164 = vmatprep.subr.mxu0 0.0
  %165 = vmatpush2.msra.mxu0 0.0
  %166 = vmatprep.subr.mxu0 0.0
  %167 = vmatpush2.msra.mxu0 0.0
  %168 = vmatprep.subr.mxu0 0.0
  %169 = vmatpush2.msra.mxu0 0.0
  %170 = vmatprep.subr.mxu0 0.0
  %171 = vmatpush2.msra.mxu0 0.0
  %172 = vmatprep.subr.mxu0 0.0
  %173 = vmatpush2.msra.mxu0 0.0
  %174 = vmatprep.subr.mxu0 0.0
  %175 = vmatpush2.msra.mxu0 0.0
  %176 = vmatprep.subr.mxu0 0.0
  %177 = vmatpush2.msra.mxu0 0.0
  %178 = vmatprep.subr.mxu0 0.0
  %179 = vmatpush2.msra.mxu0 0.0
  %180 = vmatprep.subr.mxu0 0.0
  %181 = vmatpush2.msra.mxu0 0.0
  %182 = vmatprep.subr.mxu0 0.0
  %183 = vmatpush2.msra.mxu0 0.0
  %184 = vmatprep.subr.mxu0 0.0
  %185 = vmatpush2.msra.mxu0 0.0
  %186 = vmatprep.subr.mxu0 0.0
  %187 = vmatpush2.msra.mxu0 0.0
  %188 = vmatprep.subr.mxu0 0.0
  %189 = vmatpush2.msra.mxu0 0.0
  %190 = vmatprep.subr.mxu0 0.0
  %191 = vmatpush2.msra.mxu0 0.0
  %192 = vmatprep.subr.mxu0 0.0
  %193 = vmatpush2.msra.mxu0 0.0
  %194 = vmatprep.subr.mxu0 0.0
  %195 = vmatpush2.msra.mxu0 0.0
  %196 = vmatprep.mubr.f32.mxu0 0.0
  %197 = vmatmul.mubr.f32.gmra.mxu0 %v13
  %v198 = vpop.f32.mrf.mxu0
  %v199 = vadd.f32 %v129, %v198
  %v200 = vpop.f32.mrf.mxu0
  %201 = vdwg.mxu0
  %202 = vst [vmem:[%s2] sm:$0xff] %v199
  // Predicated region
  $region10: #{audiometric_fir_forward.1} parent=0 // pred_check
    _
  $region11: #{audiometric_fir_forward.1} parent=0 // pred_check_branch
    %204 = sbr.rel (0) target = $region13
  $region12: #{audiometric_fir_forward.1} parent=0 // pred_region
    _
  $region13: #{audiometric_fir_forward.1} parent=0 // pred_fallthru
    _
  // Predicated region
  $region14: #{audiometric_fir_forward.1} parent=0 // pred_check
    _
  $region15: #{audiometric_fir_forward.1} parent=0 // pred_check_branch
    %206 = sbr.rel (0) target = $region17
  $region16: #{audiometric_fir_forward.1} parent=0 // pred_region
    _
  $region17: #{audiometric_fir_forward.1} parent=0 // pred_fallthru
    _

</llo_original>
